<compile_context>
chip_gen: v6e
topology: v6e:2x2x1
jax: 0.10.0
libtpu: 0.0.40
codegen_flags: <defaults>
</compile_context>

<pallas_src>
import functools

import jax
import jax.numpy as jnp
from jax.experimental import pallas as pl
from jax.experimental.pallas import tpu as pltpu


def _rmsnorm_kernel(x_ref, w_ref, o_ref, *, eps, inv_dim):
    # x_ref: (tm, D) tile, w_ref: (1, D), o_ref: (tm, D)
    x = x_ref[...].astype(jnp.float32)                       # x.float()
    ms = jnp.sum(x * x, axis=-1, keepdims=True) * inv_dim    # pow(2).mean(-1, keepdim=True)
    inv = jax.lax.rsqrt(ms + eps)                            # rsqrt(... + eps)
    normed = (x * inv).astype(x_ref.dtype)                   # .type_as(x)
    out = normed.astype(jnp.float32) * w_ref[...].astype(jnp.float32)  # * self.weight
    o_ref[...] = out.astype(o_ref.dtype)


def _round_up(n: int, m: int) -> int:
    return ((n + m - 1) // m) * m


def _choose_block_rows(rows, dim, in_itemsize, out_itemsize,
                       max_block_rows=1024, vmem_budget_bytes=32 << 20):
    """Largest power-of-two row tile whose pipelined footprint fits the budget."""
    def footprint(tm):
        # double-buffered input + output tiles + ~one fp32 working tile
        return tm * dim * (2 * in_itemsize + 2 * out_itemsize + 4)

    tm = max_block_rows
    while tm > 16 and footprint(tm) > vmem_budget_bytes:
        tm //= 2
    tm = max(16, tm)                       # sublane-aligned even for packed dtypes
    tm = min(tm, _round_up(rows, 16))      # don't over-tile tiny inputs
    return tm


def rmsnorm(x, weight, eps=1e-5, *, max_block_rows=1024):
    """RMSNorm over the last axis of x. Matches the PyTorch reference forward."""
    orig_shape = x.shape
    dim = orig_shape[-1]
    x2d = x.reshape(-1, dim)
    rows = x2d.shape[0]

    # torch: `_norm(x.float()).type_as(x) * self.weight` -> result dtype is the
    # promotion of x.dtype and weight.dtype (fp32 weight + bf16 x -> fp32 out).
    out_dtype = jnp.promote_types(x.dtype, weight.dtype)

    in_itemsize = jnp.dtype(x.dtype).itemsize
    out_itemsize = jnp.dtype(out_dtype).itemsize
    tm = _choose_block_rows(rows, dim, in_itemsize, out_itemsize,
                            max_block_rows=max_block_rows)

    # Pad rows to a multiple of the tile (padded rows normalize to 0 and are sliced off).
    rows_padded = _round_up(rows, tm)
    if rows_padded != rows:
        x2d = jnp.pad(x2d, ((0, rows_padded - rows), (0, 0)))

    grid = (rows_padded // tm,)
    w2d = weight.reshape(1, dim)
    inv_dim = 1.0 / float(dim)

    kernel = functools.partial(_rmsnorm_kernel, eps=float(eps), inv_dim=inv_dim)

    # NOTE: if dim is small / not a multiple of 128, output stores are lane-masked;
    # for production small-dim cases pad dim to 128 in the wrapper.
    out = pl.pallas_call(
        kernel,
        out_shape=jax.ShapeDtypeStruct((rows_padded, dim), out_dtype),
        grid_spec=pltpu.PrefetchScalarGridSpec(
            num_scalar_prefetch=0,
            grid=grid,
            in_specs=[
                pl.BlockSpec((tm, dim), lambda i: (i, 0)),
                pl.BlockSpec((1, dim), lambda i: (0, 0)),
            ],
            out_specs=pl.BlockSpec((tm, dim), lambda i: (i, 0)),
        ),
        compiler_params=pltpu.CompilerParams(
            dimension_semantics=("parallel",),
            vmem_limit_bytes=48 << 20,
        ),
    )(x2d, w2d)

    if rows_padded != rows:
        out = out[:rows]
    return out.reshape(orig_shape[:-1] + (dim,))


def rmsnorm_ref(x, weight, eps=1e-5):
    xf = x.astype(jnp.float32)
    inv = jax.lax.rsqrt(jnp.mean(xf * xf, axis=-1, keepdims=True) + eps)
    normed = (xf * inv).astype(x.dtype)
    out_dtype = jnp.promote_types(x.dtype, weight.dtype)
    return (normed.astype(jnp.float32) * weight.astype(jnp.float32)).astype(out_dtype)


if __name__ == "__main__":
    key = jax.random.PRNGKey(0)
    batch, seq, hidden = 2, 8, 32

    x = jax.random.normal(key, (batch, seq, hidden), dtype=jnp.float32)
    # deterministic parameter init: ones, matching nn.Parameter(torch.ones(dim))
    weight = jnp.ones((hidden,), dtype=jnp.float32)

    out = rmsnorm(x, weight, eps=1e-5)
    out = jax.block_until_ready(out)

    ref = rmsnorm_ref(x, weight, eps=1e-5)
    assert out.shape == x.shape and out.dtype == ref.dtype
    assert jnp.allclose(out, ref, atol=1e-5, rtol=1e-5)

    print("KERNEL_OK")
</pallas_src>

<mosaic_0001>
module attributes {stable_mosaic.version = 11 : i64} {
  func.func @_rmsnorm_kernel(%arg0: i32, %arg1: memref<16x32xf32, #tpu.memory_space<vmem>>, %arg2: memref<1x32xf32, #tpu.memory_space<vmem>>, %arg3: memref<16x32xf32, #tpu.memory_space<vmem>>) attributes {dimension_semantics = [#tpu.dimension_semantics<parallel>], iteration_bounds = array<i64: 1>, scalar_prefetch = 0 : i64, scratch_operands = 0 : i64, tpu.core_type = #tpu.core_type<tc>, window_params = [{transform_indices = @transform_0, window_bounds = array<i64: 16, 32>}, {pipeline_mode = #tpu.pipeline_mode<synchronous>, transform_indices = @transform_1, window_bounds = array<i64: 1, 32>}, {transform_indices = @transform_2, window_bounds = array<i64: 16, 32>}]} {
    %c0 = arith.constant 0 : index
    %c0_0 = arith.constant 0 : index
    %0 = vector.load %arg1[%c0, %c0_0] : memref<16x32xf32, #tpu.memory_space<vmem>>, vector<16x32xf32>
    %1 = arith.mulf %0, %0 : vector<16x32xf32>
    %cst = arith.constant dense<0.000000e+00> : vector<16xf32>
    %2 = vector.multi_reduction <add>, %1, %cst [1] : vector<16x32xf32> to vector<16xf32>
    %3 = vector.shape_cast %2 : vector<16xf32> to vector<16x1xf32>
    %cst_1 = arith.constant 3.125000e-02 : f32
    %4 = vector.broadcast %cst_1 : f32 to vector<16x1xf32>
    %5 = arith.mulf %3, %4 : vector<16x1xf32>
    %cst_2 = arith.constant 9.99999974E-6 : f32
    %6 = vector.broadcast %cst_2 : f32 to vector<16x1xf32>
    %7 = arith.addf %5, %6 : vector<16x1xf32>
    %8 = math.rsqrt %7 : vector<16x1xf32>
    %9 = vector.broadcast %8 : vector<16x1xf32> to vector<16x32xf32>
    %10 = arith.mulf %0, %9 : vector<16x32xf32>
    %c0_3 = arith.constant 0 : index
    %c0_4 = arith.constant 0 : index
    %11 = vector.load %arg2[%c0_3, %c0_4] : memref<1x32xf32, #tpu.memory_space<vmem>>, vector<1x32xf32>
    %12 = vector.broadcast %11 : vector<1x32xf32> to vector<16x32xf32>
    %13 = arith.mulf %10, %12 : vector<16x32xf32>
    %c0_5 = arith.constant 0 : index
    %c0_6 = arith.constant 0 : index
    %14 = vector.load %arg3[%c0_5, %c0_6] : memref<16x32xf32, #tpu.memory_space<vmem>>, vector<16x32xf32>
    tpu.vector_store %arg3[%c0_5, %c0_6], %13 {strides = array<i32>} : memref<16x32xf32, #tpu.memory_space<vmem>>, vector<16x32xf32>,
    return
  }
  func.func @transform_0(%arg0: i32) -> (i32, i32) {
    %c0_i32 = arith.constant 0 : i32
    %c0_i32_0 = arith.constant 0 : i32
    return %arg0, %c0_i32 : i32, i32
  }
  func.func @transform_1(%arg0: i32) -> (i32, i32) {
    %c0_i32 = arith.constant 0 : i32
    %c0_i32_0 = arith.constant 0 : i32
    %c0_i32_1 = arith.constant 0 : i32
    return %c0_i32, %c0_i32_0 : i32, i32
  }
  func.func @transform_2(%arg0: i32) -> (i32, i32) {
    %c0_i32 = arith.constant 0 : i32
    %c0_i32_0 = arith.constant 0 : i32
    return %arg0, %c0_i32 : i32, i32
  }
}

</mosaic_0001>

<llo_original>
// kernel: tpu_custom_call.1
$region0: #{tpu_custom_call.1}
  #allocation0 [shape = 'u32[]', space=smem, size = 0x4, offset = 0x4, fixed_abs, tag = 'smem constant byte address 0x4 - core index']
  #allocation1 [shape = 'u32[144,128]{1,0:T(1,128)}', space=vmem, size = 0x12000, scoped, tag = 'internal scratch']
  %s0 = inlined_call_operand.hbm [shape: f32[16,32], index: 0, kind: input, shape index: {}]
  %s1 = inlined_call_operand.vmem [shape: f32[1,32], index: 1, kind: input, shape index: {}]
  %s2 = inlined_call_operand.hbm [shape: f32[16,32], index: 2, kind: output, shape index: {}]
  %s3 = sld [smem:[#allocation0]]
  $region22: #{tpu_custom_call.1} parent=0
    _
  %s5 = ssub.s32 1, %s3
  %s6 = scalar_select 0, %s5, %s3
  $region1: #{tpu_custom_call.1} parent=0
    #allocation2 [shape = 'u8[8192]{0}', space=vmem, size = 0x2000, scoped, tag = 'input window, operand 0, single buffered']
    #allocation3 [shape = 's32[1]{0}', space=sflag, size = 0x4, scoped, tag = 'scoped memory for tpu_custom_call.1']
    #allocation4 [shape = 's32[1]{0}', space=sflag, size = 0x4, scoped, tag = 'scoped memory for tpu_custom_call.1']
    #allocation5 [shape = 'u8[8192]{0}', space=vmem, size = 0x2000, scoped, tag = 'output window, operand 0, single buffered']
    %7 = vsyncpa [#allocation3], 0
    %8 = vsyncpa [#allocation4], 0
    // Predicated region
    $region2: #{tpu_custom_call.1} parent=1 // pred_check
      _
    $region3: #{tpu_custom_call.1} parent=1 // pred_check_branch
      %10 = sbr.rel (0) target = $region5
    $region4: #{tpu_custom_call.1} parent=1 // pred_region
      %s12 = ssub.s32 256, 256
      %13 = vsyncadd [#allocation3], %s12
      %s14 = sshll.u32 [#allocation2], 4
      %s15 = int_to_ptr.vmem [resolvable:$true] %s14
      %20 = dma.hbm_to_vmem [thread:$0]  %s0, 256, %s15, [#allocation3], 128, 128, 8
    $region5: #{tpu_custom_call.1} parent=1 // pred_fallthru
      _
    // Predicated region
    $region6: #{tpu_custom_call.1} parent=1 // pred_check
      _
    $region7: #{tpu_custom_call.1} parent=1 // pred_check_branch
      %22 = sbr.rel (0) target = $region9
    $region8: #{tpu_custom_call.1} parent=1 // pred_region
      _
    $region9: #{tpu_custom_call.1} parent=1 // pred_fallthru
      _
    // Predicated region
    $region10: #{tpu_custom_call.1} parent=1 // pred_check
      _
    $region11: #{tpu_custom_call.1} parent=1 // pred_check_branch
      %24 = sbr.rel (0) target = $region13
    $region12: #{tpu_custom_call.1} parent=1 // pred_region
      %25 = dma.done [#allocation3], 256
    $region13: #{tpu_custom_call.1} parent=1 // pred_fallthru
      _
    %v26 = vld [vmem:[#allocation2] sm:$0xff]
    %v27 = vld [vmem:[#allocation2 + $0x8] sm:$0xff]
    %v28 = vmul.f32 %v26, %v26
    %v29 = vmul.f32 %v27, %v27
    %vm30 = vcmask 261120
    %v31 = vsel %vm30, %v28, 0.0
    %32 = vadd.xlane.f32.xlu0 %v31
    %v33 = vpop.xlane.xlu0 %32
    %v34 = vsel %vm30, %v29, 0.0
    %35 = vadd.xlane.f32.xlu0 %v34
    %v36 = vpop.xlane.xlu0 %35
    %v37 = vmul.f32 %v33, 0.03125
    %v38 = vmul.f32 %v36, 0.03125
    %v39 = vadd.f32 %v37, 1e-05
    %v40 = vadd.f32 %v38, 1e-05
    %v41 = vrsqrt.pop %v39
    %v42 = vrsqrt.pop %v40
    %v43 = vmul.f32 %v26, %v41
    %v44 = vmul.f32 %v27, %v42
    %v45 = vld [vmem:[%s1] sm:$0x1]
    %v47 = vlaneseq
    %v48 = vshrl.u32 %v47, 7
    %v49 = vsub.s32 0, %v48
    %v50 = vrot.slane %v45, %v49
    %v52 = vmul.f32 %v43, %v50
    %v53 = vmul.f32 %v44, %v50
    %54 = vst.msk [vmem:[#allocation5] sm:$0xff] %vm30, %v52
    %55 = vst.msk [vmem:[#allocation5 + $0x8] sm:$0xff] %vm30, %v53
    // Predicated region
    $region14: #{tpu_custom_call.1} parent=1 // pred_check
      _
    $region15: #{tpu_custom_call.1} parent=1 // pred_check_branch
      %57 = sbr.rel (0) target = $region17
    $region16: #{tpu_custom_call.1} parent=1 // pred_region
      %s59 = ssub.s32 256, 256
      %60 = vsyncadd [#allocation4], %s59
      %s61 = sshll.u32 [#allocation5], 4
      %s62 = int_to_ptr.vmem [resolvable:$true] %s61
      %67 = dma.vmem_to_hbm [thread:$0]  %s62, 256, %s2, [#allocation4], 128, 128, 8
    $region17: #{tpu_custom_call.1} parent=1 // pred_fallthru
      _
    // Predicated region
    $region18: #{tpu_custom_call.1} parent=1 // pred_check
      _
    $region19: #{tpu_custom_call.1} parent=1 // pred_check_branch
      %69 = sbr.rel (0) target = $region21
    $region20: #{tpu_custom_call.1} parent=1 // pred_region
      %70 = dma.done [#allocation4], 256
    $region21: #{tpu_custom_call.1} parent=1 // pred_fallthru
      _
    %71 = vsyncpa [#allocation3], 1
    %72 = vsyncpa [#allocation4], 1

</llo_original>
